<compile_context>
chip_gen: v7x
topology: tpu7x:2x2x1
jax: 0.10.0
libtpu: 0.0.40
codegen_flags: <defaults>
</compile_context>

<pallas_src>
import jax
import jax.numpy as jnp
from jax.experimental import pallas as pl
from jax.experimental.pallas import tpu as pltpu


# --------------------------------------------------------------------------------------
# Kernels
# --------------------------------------------------------------------------------------
def _silu_f32(h):
    # SiLU with a single transcendental: x * sigmoid(x) == 0.5 * x * (1 + tanh(x / 2)).
    return 0.5 * h * (1.0 + jnp.tanh(0.5 * h))


def _ffn_kernel_resident(x_ref, w1_ref, b1_ref, w2_ref, b2_ref, o_ref):
    # Weights fully resident in VMEM: single fused pass, no scratch, no pl.when.
    x = x_ref[...]
    h = jnp.dot(x, w1_ref[...], preferred_element_type=jnp.float32) + b1_ref[...]
    h = _silu_f32(h)
    out = jnp.dot(h.astype(x.dtype), w2_ref[...], preferred_element_type=jnp.float32)
    o_ref[...] = (out + b2_ref[...]).astype(o_ref.dtype)


def _ffn_kernel_chunked(x_ref, w1_ref, b1_ref, w2_ref, b2_ref, o_ref, acc_ref):
    # Hidden dimension tiled along grid axis 1 ("arbitrary"); f32 accumulator scratch.
    h_idx = pl.program_id(1)

    @pl.when(h_idx == 0)
    def _init():
        acc_ref[...] = jnp.zeros_like(acc_ref)

    x = x_ref[...]
    h = jnp.dot(x, w1_ref[...], preferred_element_type=jnp.float32) + b1_ref[...]
    h = _silu_f32(h)
    acc_ref[...] += jnp.dot(h.astype(x.dtype), w2_ref[...],
                            preferred_element_type=jnp.float32)

    @pl.when(h_idx == pl.num_programs(1) - 1)
    def _finalize():
        o_ref[...] = (acc_ref[...] + b2_ref[...]).astype(o_ref.dtype)


# --------------------------------------------------------------------------------------
# One-time feature detection (NOT in the hot path; cached for the process lifetime)
# --------------------------------------------------------------------------------------
def _probe_copy_kernel(x_ref, o_ref):
    o_ref[...] = x_ref[...]


_KNOBS_SUPPORTED = None


def _optional_knobs_supported():
    """Check once whether pl.Buffered(1) + vmem_limit_bytes are accepted."""
    global _KNOBS_SUPPORTED
    if _KNOBS_SUPPORTED is None:
        try:
            x = jnp.zeros((8, 128), jnp.float32)
            out = pl.pallas_call(
                _probe_copy_kernel,
                out_shape=jax.ShapeDtypeStruct((8, 128), jnp.float32),
                grid_spec=pltpu.PrefetchScalarGridSpec(
                    num_scalar_prefetch=0,
                    grid=(1,),
                    in_specs=[pl.BlockSpec((8, 128), lambda i: (0, 0),
                                           pipeline_mode=pl.Buffered(1))],
                    out_specs=pl.BlockSpec((8, 128), lambda i: (0, 0)),
                ),
                compiler_params=pltpu.CompilerParams(
                    dimension_semantics=("arbitrary",),
                    vmem_limit_bytes=32 * 1024 * 1024),
            )(x)
            jax.block_until_ready(out)
            _KNOBS_SUPPORTED = True
        except Exception:
            _KNOBS_SUPPORTED = False
    return _KNOBS_SUPPORTED


# --------------------------------------------------------------------------------------
# Planning helpers
# --------------------------------------------------------------------------------------
def _round_up(x, m):
    return (x + m - 1) // m * m


def _vmem_budgets():
    """Generation-aware VMEM budgets (v5e/v6e: 128 MiB VMEM; v7x: 64 MiB)."""
    try:
        cap = int(pltpu.get_tpu_info().vmem_capacity_bytes)
    except Exception:
        cap = 64 * 1024 * 1024  # conservative default (v7x-sized)
    budget = int(cap * 0.45)    # tile-picking working-set budget (keeps headroom)
    limit = int(cap * 0.75)     # scoped VMEM limit handed to Mosaic
    return budget, limit


def _pick_tm(M, sub, tm_req):
    # Keep >= 2 steps on the "parallel" row axis when possible so both v7x TensorCores
    # get work; harmless on 1-TC chips (v5e/v6e).  Never below one sublane group.
    return max(sub, min(tm_req, _round_up(pl.cdiv(M, 2), sub)))


def _pick_hidden_tile(hidden_p, dim_p, tm, in_itemsize, out_itemsize, budget_bytes):
    """Largest hidden tile (multiple of 128, dividing hidden_p) whose working set fits.

    Iterating n_chunks ascending means the largest (and therefore most MXU-friendly,
    >= 256-wide whenever it fits) tile is preferred; n_chunks == 1 keeps the weights
    fully resident and single-buffered.
    """
    for n_chunks in range(1, hidden_p // 128 + 1):
        if hidden_p % n_chunks:
            continue
        th = hidden_p // n_chunks
        if th % 128:
            continue
        resident = (n_chunks == 1)
        wf = 1 if resident else 2                              # Buffered(1) vs double-buffer
        weight_bytes = wf * 2 * dim_p * th * in_itemsize       # W1 + W2 tiles
        bias_bytes = wf * (th + dim_p) * 4                     # f32 biases
        act_bytes = (2 * tm * dim_p * in_itemsize              # x tiles (double-buffered)
                     + 2 * tm * dim_p * out_itemsize           # out tiles (double-buffered)
                     + tm * th * 4                             # f32 SiLU intermediate
                     + tm * th * in_itemsize)                  # cast copy fed to 2nd matmul
        if not resident:
            act_bytes += tm * dim_p * 4                        # f32 accumulator scratch
        if weight_bytes + bias_bytes + act_bytes <= budget_bytes:
            return th
    return 128


def _build_ffn_call(M_p, dim_p, hidden_p, tm, th, out_dtype, *,
                    use_knobs, vmem_limit_bytes, cost_estimate):
    n_h = hidden_p // th
    resident = (n_h == 1)
    # Fully-resident weights (constant index maps) -> single-buffer to halve VMEM.
    w_kwargs = dict(pipeline_mode=pl.Buffered(1)) if (resident and use_knobs) else {}

    cp_kwargs = {}
    if use_knobs and vmem_limit_bytes is not None:
        cp_kwargs["vmem_limit_bytes"] = int(vmem_limit_bytes)

    if resident:
        grid_spec = pltpu.PrefetchScalarGridSpec(
            num_scalar_prefetch=0,
            grid=(M_p // tm,),
            in_specs=[
                pl.BlockSpec((tm, dim_p), lambda i: (i, 0)),                   # x row tile
                pl.BlockSpec((dim_p, hidden_p), lambda i: (0, 0), **w_kwargs), # W1
                pl.BlockSpec((1, hidden_p), lambda i: (0, 0), **w_kwargs),     # b1
                pl.BlockSpec((hidden_p, dim_p), lambda i: (0, 0), **w_kwargs), # W2
                pl.BlockSpec((1, dim_p), lambda i: (0, 0), **w_kwargs),        # b2
            ],
            out_specs=pl.BlockSpec((tm, dim_p), lambda i: (i, 0)),
        )
        kernel = _ffn_kernel_resident
        cp_kwargs["dimension_semantics"] = ("parallel",)
    else:
        grid_spec = pltpu.PrefetchScalarGridSpec(
            num_scalar_prefetch=0,
            grid=(M_p // tm, n_h),
            in_specs=[
                pl.BlockSpec((tm, dim_p), lambda i, h: (i, 0)),        # x row tile
                pl.BlockSpec((dim_p, th), lambda i, h: (0, h)),        # W1 tile
                pl.BlockSpec((1, th), lambda i, h: (0, h)),            # b1 tile
                pl.BlockSpec((th, dim_p), lambda i, h: (h, 0)),        # W2 tile
                pl.BlockSpec((1, dim_p), lambda i, h: (0, 0)),         # b2
            ],
            out_specs=pl.BlockSpec((tm, dim_p), lambda i, h: (i, 0)),
            scratch_shapes=[pltpu.VMEM((tm, dim_p), jnp.float32)],
        )
        kernel = _ffn_kernel_chunked
        cp_kwargs["dimension_semantics"] = ("parallel", "arbitrary")

    return pl.pallas_call(
        kernel,
        out_shape=jax.ShapeDtypeStruct((M_p, dim_p), out_dtype),
        grid_spec=grid_spec,
        compiler_params=pltpu.CompilerParams(**cp_kwargs),
        cost_estimate=cost_estimate,
    )


# --------------------------------------------------------------------------------------
# Core (jit-traceable; all shape logic is static)
# --------------------------------------------------------------------------------------
def _feed_forward_core(x, w1_p, b1_p, w2_p, b2_p, *, dim, hidden, compute_dtype,
                       out_dtype, tm, th, use_knobs):
    assert x.shape[-1] == dim, (x.shape, dim)
    lead_shape = x.shape[:-1]
    M = 1
    for s in lead_shape:
        M *= int(s)

    out_dtype = jnp.dtype(x.dtype if out_dtype is None else out_dtype)
    compute_dtype = jnp.dtype(compute_dtype)
    in_itemsize = compute_dtype.itemsize
    out_itemsize = out_dtype.itemsize

    dim_p, hidden_p = w1_p.shape
    sub = 8 * (4 // in_itemsize)                    # f32 -> 8, bf16 -> 16 rows / vreg
    tm_eff = _pick_tm(M, sub, tm)

    budget, vmem_limit = _vmem_budgets()
    th_val = th if th is not None else _pick_hidden_tile(
        hidden_p, dim_p, tm_eff, in_itemsize, out_itemsize, budget)
    assert hidden_p % th_val == 0 and th_val % 128 == 0, (hidden_p, th_val)
    n_h = hidden_p // th_val

    # Chunked hidden => W1/W2 are re-streamed once per row tile: for large M prefer
    # bigger row tiles (fewer tiles -> less weight traffic).
    if th is None and n_h > 1 and M >= 4 * tm_eff and tm_eff < 512:
        tm_eff = _pick_tm(M, sub, 512)
        th_val = _pick_hidden_tile(hidden_p, dim_p, tm_eff, in_itemsize, out_itemsize,
                                   budget)
        n_h = hidden_p // th_val

    M_p = _round_up(M, tm_eff)
    n_rows = M_p // tm_eff

    # Only x is padded per call (zero padding provably contributes zero to the result).
    x2 = x.reshape(M, dim)
    if (M_p, dim_p) != (M, dim):
        x2 = jnp.pad(x2, ((0, M_p - M), (0, dim_p - dim)))
    x2 = x2.astype(compute_dtype)

    weight_stream = 1 if n_h == 1 else n_rows       # re-stream factor when chunked
    cost = pl.CostEstimate(
        flops=4 * M_p * dim_p * hidden_p,
        transcendentals=M_p * hidden_p,
        bytes_accessed=(M_p * dim_p * (in_itemsize + out_itemsize)
                        + weight_stream * 2 * dim_p * hidden_p * in_itemsize
                        + (hidden_p + dim_p) * 4),
    )

    call = _build_ffn_call(M_p, dim_p, hidden_p, tm_eff, th_val, out_dtype,
                           use_knobs=use_knobs, vmem_limit_bytes=vmem_limit,
                           cost_estimate=cost)
    out_p = call(x2, w1_p, b1_p, w2_p, b2_p)

    out2 = out_p[:M, :dim]
    if out2.dtype != out_dtype:
        out2 = out2.astype(out_dtype)
    return out2.reshape(*lead_shape, dim)


# --------------------------------------------------------------------------------------
# Public wrappers
# --------------------------------------------------------------------------------------
def prepare_ffn_params(w1, b1, w2, b2, compute_dtype=jnp.bfloat16):
    """Pad weights/biases to lane multiples and cast ONCE (hoisted out of the hot path)."""
    dim, hidden = w1.shape
    dim_p = _round_up(dim, 128)
    hidden_p = _round_up(hidden, 128)
    compute_dtype = jnp.dtype(compute_dtype)

    def pad2(a, rows_p, cols_p):
        r, c = a.shape
        if (r, c) != (rows_p, cols_p):
            a = jnp.pad(a, ((0, rows_p - r), (0, cols_p - c)))
        return a

    w1_p = pad2(w1, dim_p, hidden_p).astype(compute_dtype)
    w2_p = pad2(w2, hidden_p, dim_p).astype(compute_dtype)
    b1_p = pad2(b1.reshape(1, -1), 1, hidden_p).astype(jnp.float32)
    b2_p = pad2(b2.reshape(1, -1), 1, dim_p).astype(jnp.float32)
    return (w1_p, b1_p, w2_p, b2_p), (dim, hidden, compute_dtype)


def make_feed_forward(w1, b1, w2, b2, *, compute_dtype=jnp.bfloat16, out_dtype=None,
                      tm=256, th=None):
    """Build a jit-wrapped apply(x). Weight padding/casting happens once, here."""
    padded, (dim, hidden, cdt) = prepare_ffn_params(w1, b1, w2, b2, compute_dtype)
    use_knobs = _optional_knobs_supported()

    @jax.jit
    def _apply(x, w1_p, b1_p, w2_p, b2_p):
        return _feed_forward_core(x, w1_p, b1_p, w2_p, b2_p, dim=dim, hidden=hidden,
                                  compute_dtype=cdt, out_dtype=out_dtype, tm=tm, th=th,
                                  use_knobs=use_knobs)

    return lambda x: _apply(x, *padded)


def feed_forward(x, w1, b1, w2, b2, *, compute_dtype=jnp.bfloat16, out_dtype=None,
                 tm=256, th=None):
    """One-shot convenience. For repeated calls use make_feed_forward (pads once)."""
    padded, (dim, hidden, cdt) = prepare_ffn_params(w1, b1, w2, b2, compute_dtype)
    return _feed_forward_core(x, *padded, dim=dim, hidden=hidden, compute_dtype=cdt,
                              out_dtype=out_dtype, tm=tm, th=th,
                              use_knobs=_optional_knobs_supported())


# --------------------------------------------------------------------------------------
# Reference + params
# --------------------------------------------------------------------------------------
def init_params(key, dim, hidden_dim, dtype=jnp.float32):
    """Deterministic init mimicking nn.Linear default (uniform(-1/sqrt(fan_in), ...))."""
    k1, k2, k3, k4 = jax.random.split(key, 4)
    bound1 = 1.0 / (dim ** 0.5)
    bound2 = 1.0 / (hidden_dim ** 0.5)
    # Stored already transposed to (in, out) for the kernel's x @ W convention.
    w1 = jax.random.uniform(k1, (dim, hidden_dim), dtype, -bound1, bound1)
    b1 = jax.random.uniform(k2, (1, hidden_dim), dtype, -bound1, bound1)
    w2 = jax.random.uniform(k3, (hidden_dim, dim), dtype, -bound2, bound2)
    b2 = jax.random.uniform(k4, (1, dim), dtype, -bound2, bound2)
    return w1, b1, w2, b2


def feed_forward_ref(x, w1, b1, w2, b2):
    """Pure-JAX reference (eval mode: dropout is identity)."""
    h = jnp.dot(x, w1) + b1[0]
    h = h * jax.nn.sigmoid(h)
    return jnp.dot(h, w2) + b2[0]


if __name__ == "__main__":
    key = jax.random.PRNGKey(0)
    kx, kp, kx2, kp2 = jax.random.split(key, 4)

    # --- Config 1: small MobileViT-like MLP (dim/hidden below one lane) ---------------
    B, N, dim, hidden_dim = 2, 8, 32, 64
    x = jax.random.normal(kx, (B, N, dim), jnp.float32)
    w1, b1, w2, b2 = init_params(kp, dim, hidden_dim)
    ref = feed_forward_ref(x, w1, b1, w2, b2)

    # Exact-precision path (f32 matmuls) -> tight tolerance vs. the reference.
    out_f32 = feed_forward(x, w1, b1, w2, b2, compute_dtype=jnp.float32)
    out_f32 = jax.block_until_ready(out_f32)
    assert out_f32.shape == (B, N, dim), out_f32.shape
    assert jnp.allclose(out_f32, ref, atol=1e-4, rtol=1e-4), \
        float(jnp.max(jnp.abs(out_f32 - ref)))

    # Default fast path: weights padded/cast ONCE, bf16 matmuls + f32 accumulation,
    # jitted apply(x) (no per-call weight padding, no sync in the hot path).
    ffn = make_feed_forward(w1, b1, w2, b2)          # compute_dtype defaults to bf16
    out_bf16 = jax.block_until_ready(ffn(x))
    _ = jax.block_until_ready(ffn(x))                # second call: cached, no re-pad
    assert out_bf16.shape == (B, N, dim), out_bf16.shape
    assert jnp.allclose(out_bf16, ref, atol=3e-2, rtol=3e-2), \
        float(jnp.max(jnp.abs(out_bf16 - ref)))

    # --- Config 2: force the hidden-chunked accumulator path (th=128 -> n_h=2) --------
    dim2, hidden2 = 96, 256
    x_b = jax.random.normal(kx2, (B, N, dim2), jnp.float32)
    params2 = init_params(kp2, dim2, hidden2)
    ref2 = feed_forward_ref(x_b, *params2)
    out2 = feed_forward(x_b, *params2, compute_dtype=jnp.float32, th=128)
    out2 = jax.block_until_ready(out2)
    assert out2.shape == (B, N, dim2), out2.shape
    assert jnp.allclose(out2, ref2, atol=1e-4, rtol=1e-4), \
        float(jnp.max(jnp.abs(out2 - ref2)))

    print("KERNEL_OK")
</pallas_src>

<mosaic_0001>
module attributes {stable_mosaic.version = 11 : i64} {
  func.func @_probe_copy_kernel(%arg0: i32, %arg1: memref<8x128xf32, #tpu.memory_space<vmem>>, %arg2: memref<8x128xf32, #tpu.memory_space<vmem>>) attributes {dimension_semantics = [#tpu.dimension_semantics<arbitrary>], iteration_bounds = array<i64: 1>, scalar_prefetch = 0 : i64, scratch_operands = 0 : i64, tpu.core_type = #tpu.core_type<tc>, window_params = [{pipeline_mode = #tpu.pipeline_mode<synchronous>, transform_indices = @transform_0, window_bounds = array<i64: 8, 128>}, {pipeline_mode = #tpu.pipeline_mode<synchronous>, transform_indices = @transform_1, window_bounds = array<i64: 8, 128>}]} {
    %c0 = arith.constant 0 : index
    %c0_0 = arith.constant 0 : index
    %0 = vector.load %arg1[%c0, %c0_0] : memref<8x128xf32, #tpu.memory_space<vmem>>, vector<8x128xf32>
    %c0_1 = arith.constant 0 : index
    %c0_2 = arith.constant 0 : index
    %1 = vector.load %arg2[%c0_1, %c0_2] : memref<8x128xf32, #tpu.memory_space<vmem>>, vector<8x128xf32>
    tpu.vector_store %arg2[%c0_1, %c0_2], %0 {strides = array<i32>} : memref<8x128xf32, #tpu.memory_space<vmem>>, vector<8x128xf32>,
    return
  }
  func.func @transform_0(%arg0: i32) -> (i32, i32) {
    %c0_i32 = arith.constant 0 : i32
    %c0_i32_0 = arith.constant 0 : i32
    %c0_i32_1 = arith.constant 0 : i32
    return %c0_i32, %c0_i32_0 : i32, i32
  }
  func.func @transform_1(%arg0: i32) -> (i32, i32) {
    %c0_i32 = arith.constant 0 : i32
    %c0_i32_0 = arith.constant 0 : i32
    %c0_i32_1 = arith.constant 0 : i32
    return %c0_i32, %c0_i32_0 : i32, i32
  }
}

module attributes {stable_mosaic.version = 11 : i64} {
  func.func @_ffn_kernel_resident(%arg0: i32, %arg1: memref<8x128xf32, #tpu.memory_space<vmem>>, %arg2: memref<128x128xf32, #tpu.memory_space<vmem>>, %arg3: memref<1x128xf32, #tpu.memory_space<vmem>>, %arg4: memref<128x128xf32, #tpu.memory_space<vmem>>, %arg5: memref<1x128xf32, #tpu.memory_space<vmem>>, %arg6: memref<8x128xf32, #tpu.memory_space<vmem>>) attributes {dimension_semantics = [#tpu.dimension_semantics<parallel>], iteration_bounds = array<i64: 2>, scalar_prefetch = 0 : i64, scratch_operands = 0 : i64, tpu.core_type = #tpu.core_type<tc>, window_params = [{transform_indices = @transform_0, window_bounds = array<i64: 8, 128>}, {pipeline_mode = #tpu.pipeline_mode<synchronous>, transform_indices = @transform_1, window_bounds = array<i64: 128, 128>}, {pipeline_mode = #tpu.pipeline_mode<synchronous>, transform_indices = @transform_2, window_bounds = array<i64: 1, 128>}, {pipeline_mode = #tpu.pipeline_mode<synchronous>, transform_indices = @transform_3, window_bounds = array<i64: 128, 128>}, {pipeline_mode = #tpu.pipeline_mode<synchronous>, transform_indices = @transform_4, window_bounds = array<i64: 1, 128>}, {transform_indices = @transform_5, window_bounds = array<i64: 8, 128>}]} {
    %c0 = arith.constant 0 : index
    %c0_0 = arith.constant 0 : index
    %0 = vector.load %arg1[%c0, %c0_0] : memref<8x128xf32, #tpu.memory_space<vmem>>, vector<8x128xf32>
    %c0_1 = arith.constant 0 : index
    %c0_2 = arith.constant 0 : index
    %1 = vector.load %arg2[%c0_1, %c0_2] : memref<128x128xf32, #tpu.memory_space<vmem>>, vector<128x128xf32>
    %cst = arith.constant dense<0.000000e+00> : vector<8x128xf32>
    %2 = tpu.matmul %0, %1, %cst {dimension_numbers = #tpu.dot_dimension_numbers<[1], [0], [0], [1], [0, 0, 1, 1], [], []>} : vector<8x128xf32>, vector<128x128xf32>, vector<8x128xf32> -> vector<8x128xf32>
    %c0_3 = arith.constant 0 : index
    %c0_4 = arith.constant 0 : index
    %3 = vector.load %arg3[%c0_3, %c0_4] : memref<1x128xf32, #tpu.memory_space<vmem>>, vector<1x128xf32>
    %4 = vector.broadcast %3 : vector<1x128xf32> to vector<8x128xf32>
    %5 = arith.addf %2, %4 : vector<8x128xf32>
    %cst_5 = arith.constant 5.000000e-01 : f32
    %6 = vector.broadcast %cst_5 : f32 to vector<8x128xf32>
    %7 = arith.mulf %6, %5 : vector<8x128xf32>
    %cst_6 = arith.constant 5.000000e-01 : f32
    %8 = vector.broadcast %cst_6 : f32 to vector<8x128xf32>
    %9 = arith.mulf %8, %5 : vector<8x128xf32>
    %10 = math.tanh %9 : vector<8x128xf32>
    %cst_7 = arith.constant 1.000000e+00 : f32
    %11 = vector.broadcast %cst_7 : f32 to vector<8x128xf32>
    %12 = arith.addf %11, %10 : vector<8x128xf32>
    %13 = arith.mulf %7, %12 : vector<8x128xf32>
    %c0_8 = arith.constant 0 : index
    %c0_9 = arith.constant 0 : index
    %14 = vector.load %arg4[%c0_8, %c0_9] : memref<128x128xf32, #tpu.memory_space<vmem>>, vector<128x128xf32>
    %cst_10 = arith.constant dense<0.000000e+00> : vector<8x128xf32>
    %15 = tpu.matmul %13, %14, %cst_10 {dimension_numbers = #tpu.dot_dimension_numbers<[1], [0], [0], [1], [0, 0, 1, 1], [], []>} : vector<8x128xf32>, vector<128x128xf32>, vector<8x128xf32> -> vector<8x128xf32>
    %c0_11 = arith.constant 0 : index
    %c0_12 = arith.constant 0 : index
    %16 = vector.load %arg5[%c0_11, %c0_12] : memref<1x128xf32, #tpu.memory_space<vmem>>, vector<1x128xf32>
    %17 = vector.broadcast %16 : vector<1x128xf32> to vector<8x128xf32>
    %18 = arith.addf %15, %17 : vector<8x128xf32>
    %c0_13 = arith.constant 0 : index
    %c0_14 = arith.constant 0 : index
    %19 = vector.load %arg6[%c0_13, %c0_14] : memref<8x128xf32, #tpu.memory_space<vmem>>, vector<8x128xf32>
    tpu.vector_store %arg6[%c0_13, %c0_14], %18 {strides = array<i32>} : memref<8x128xf32, #tpu.memory_space<vmem>>, vector<8x128xf32>,
    return
  }
  func.func @transform_0(%arg0: i32) -> (i32, i32) {
    %c0_i32 = arith.constant 0 : i32
    %c0_i32_0 = arith.constant 0 : i32
    return %arg0, %c0_i32 : i32, i32
  }
  func.func @transform_1(%arg0: i32) -> (i32, i32) {
    %c0_i32 = arith.constant 0 : i32
    %c0_i32_0 = arith.constant 0 : i32
    %c0_i32_1 = arith.constant 0 : i32
    return %c0_i32, %c0_i32_0 : i32, i32
  }
  func.func @transform_2(%arg0: i32) -> (i32, i32) {
    %c0_i32 = arith.constant 0 : i32
    %c0_i32_0 = arith.constant 0 : i32
    %c0_i32_1 = arith.constant 0 : i32
    return %c0_i32, %c0_i32_0 : i32, i32
  }
  func.func @transform_3(%arg0: i32) -> (i32, i32) {
    %c0_i32 = arith.constant 0 : i32
    %c0_i32_0 = arith.constant 0 : i32
    %c0_i32_1 = arith.constant 0 : i32
    return %c0_i32, %c0_i32_0 : i32, i32
  }
  func.func @transform_4(%arg0: i32) -> (i32, i32) {
    %c0_i32 = arith.constant 0 : i32
    %c0_i32_0 = arith.constant 0 : i32
    %c0_i32_1 = arith.constant 0 : i32
    return %c0_i32, %c0_i32_0 : i32, i32
  }
  func.func @transform_5(%arg0: i32) -> (i32, i32) {
    %c0_i32 = arith.constant 0 : i32
    %c0_i32_0 = arith.constant 0 : i32
    return %arg0, %c0_i32 : i32, i32
  }
}

</mosaic_0001>

<llo_original>
// kernel: tpu_custom_call.1
$region0: #{tpu_custom_call.1}
  #allocation0 [shape = 'u32[]', space=smem, size = 0x4, offset = 0x4, fixed_abs, tag = 'smem constant byte address 0x4 - core index']
  #allocation1 [shape = 'u32[144,128]{1,0:T(1,128)}', space=vmem, size = 0x12000, scoped, tag = 'internal scratch']
  %s0 = inlined_call_operand.hbm [shape: f32[8,128], index: 0, kind: input, shape index: {}]
  %s1 = inlined_call_operand.hbm [shape: f32[8,128], index: 1, kind: output, shape index: {}]
  %s2 = sld [smem:[#allocation0]]
  $region18: #{tpu_custom_call.1} parent=0
    _
  %s4 = ssub.s32 1, %s2
  %s5 = scalar_select 0, %s4, %s2
  $region1: #{tpu_custom_call.1} parent=0
    #allocation2 [shape = 'u8[4096]{0}', space=vmem, size = 0x1000, scoped, tag = 'input window, operand 0, single buffered']
    #allocation3 [shape = 's32[1]{0}', space=sflag, size = 0x4, scoped, tag = 'scoped memory for tpu_custom_call.1']
    #allocation4 [shape = 's32[1]{0}', space=sflag, size = 0x4, scoped, tag = 'scoped memory for tpu_custom_call.1']
    #allocation5 [shape = 'u8[4096]{0}', space=vmem, size = 0x1000, scoped, tag = 'output window, operand 0, single buffered']
    %6 = vsyncpa [#allocation3], 0
    %7 = vsyncpa [#allocation4], 0
    // Predicated region
    $region2: #{tpu_custom_call.1} parent=1 // pred_check
      _
    $region3: #{tpu_custom_call.1} parent=1 // pred_check_branch
      %9 = sbr.rel (0) target = $region5
    $region4: #{tpu_custom_call.1} parent=1 // pred_region
      %s11 = ssub.s32 128, 128
      %12 = vsyncadd [#allocation3], %s11
      %s14 = sshll.u32 [#allocation2], 4
      %s15 = int_to_ptr.vmem [resolvable:$true] %s14
      %17 = dma.hbm_to_vmem [thread:$0]  %s0, 128, %s15, [#allocation3]
    $region5: #{tpu_custom_call.1} parent=1 // pred_fallthru
      _
    // Predicated region
    $region6: #{tpu_custom_call.1} parent=1 // pred_check
      _
    $region7: #{tpu_custom_call.1} parent=1 // pred_check_branch
      %19 = sbr.rel (0) target = $region9
    $region8: #{tpu_custom_call.1} parent=1 // pred_region
      %20 = dma.done [#allocation3], 128
    $region9: #{tpu_custom_call.1} parent=1 // pred_fallthru
      _
    %v21 = vld [vmem:[#allocation2] sm:$0xff]
    %22 = vst [vmem:[#allocation5] sm:$0xff] %v21
    // Predicated region
    $region10: #{tpu_custom_call.1} parent=1 // pred_check
      _
    $region11: #{tpu_custom_call.1} parent=1 // pred_check_branch
      %24 = sbr.rel (0) target = $region13
    $region12: #{tpu_custom_call.1} parent=1 // pred_region
      %s26 = ssub.s32 128, 128
      %27 = vsyncadd [#allocation4], %s26
      %s29 = sshll.u32 [#allocation5], 4
      %s30 = int_to_ptr.vmem [resolvable:$true] %s29
      %32 = dma.vmem_to_hbm [thread:$0]  %s30, 128, %s1, [#allocation4]
    $region13: #{tpu_custom_call.1} parent=1 // pred_fallthru
      _
    // Predicated region
    $region14: #{tpu_custom_call.1} parent=1 // pred_check
      _
    $region15: #{tpu_custom_call.1} parent=1 // pred_check_branch
      %34 = sbr.rel (0) target = $region17
    $region16: #{tpu_custom_call.1} parent=1 // pred_region
      %35 = dma.done [#allocation4], 128
    $region17: #{tpu_custom_call.1} parent=1 // pred_fallthru
      _
    %36 = vsyncpa [#allocation3], 1
    %37 = vsyncpa [#allocation4], 1

// kernel: tpu_custom_call.1
$region0: #{tpu_custom_call.1}
  #allocation0 [shape = 'u32[]', space=smem, size = 0x4, offset = 0x4, fixed_abs, tag = 'smem constant byte address 0x4 - core index']
  #allocation1 [shape = 'u32[144,128]{1,0:T(1,128)}', space=vmem, size = 0x12000, scoped, tag = 'internal scratch']
  %s0 = inlined_call_operand.hbm [shape: f32[16,128], index: 0, kind: input, shape index: {}]
  %s1 = inlined_call_operand.hbm [shape: f32[128,128], index: 1, kind: input, shape index: {}]
  %s2 = inlined_call_operand.vmem [shape: f32[1,128], index: 2, kind: input, shape index: {}]
  %s3 = inlined_call_operand.hbm [shape: f32[128,128], index: 3, kind: input, shape index: {}]
  %s4 = inlined_call_operand.vmem [shape: f32[1,128], index: 4, kind: input, shape index: {}]
  %s5 = inlined_call_operand.hbm [shape: f32[16,128], index: 5, kind: output, shape index: {}]
  %s6 = sld [smem:[#allocation0]]
  $region65: #{tpu_custom_call.1} parent=0
    _
  %s8 = ssub.s32 1, %s6
  %s9 = scalar_select 0, %s8, %s6
  $region1: #{tpu_custom_call.1} parent=0
    #allocation2 [shape = 'u8[8192]{0}', space=vmem, size = 0x2000, scoped, tag = 'input window, operand 0']
    #allocation3 [shape = 's32[2]{0}', space=sflag, size = 0x8, scoped, tag = 'scoped memory for tpu_custom_call.1']
    #allocation4 [shape = 's32[2]{0}', space=sflag, size = 0x8, scoped, tag = 'scoped memory for tpu_custom_call.1']
    #allocation5 [shape = 'u8[65536]{0}', space=vmem, size = 0x10000, scoped, tag = 'input window, operand 1, single buffered']
    #allocation6 [shape = 's32[1]{0}', space=sflag, size = 0x4, scoped, tag = 'scoped memory for tpu_custom_call.1']
    #allocation7 [shape = 'u8[65536]{0}', space=vmem, size = 0x10000, scoped, tag = 'input window, operand 3, single buffered']
    #allocation8 [shape = 'u8[8192]{0}', space=vmem, size = 0x2000, scoped, tag = 'output window, operand 0']
    %10 = vsyncpa [#allocation3], 0
    %s11 = scalar_lea.sflag [#allocation3], 1
    %12 = vsyncpa %s11, 0
    %13 = vsyncpa [#allocation6], 0
    %14 = vsyncpa [#allocation4], 0
    %s15 = scalar_lea.sflag [#allocation4], 1
    %16 = vsyncpa %s15, 0
    loop: start=0, step=1, limit=4
    $region2: #{tpu_custom_call.1} parent=1 // loop_pre_header
      _
    $region3: #{tpu_custom_call.1} parent=1 // loop_header
      %s18 = sphi 0, %s22
      %p19 = scmp.ge.s32.totalorder %s18, 4
      %s28 = sphi 0, %s30
      %s31 = sphi 0, %s28
      %s32 = sphi 0, %s31
      %s48 = sphi 0, %s32
      %s52 = sphi 0, %s52
      %s54 = sphi 0, %s52
      %s55 = sphi 0, %s54
      %s69 = sphi 0, %s55
      %s73 = sphi 0, %s73
      %s75 = sphi 0, %s73
      %s76 = sphi 0, %s75
      %s90 = sphi 0, %s76
      %s94 = sphi 0, %s94
      %s96 = sphi 0, %s94
      %s97 = sphi 0, %s96
      %s111 = sphi 0, %s97
      %s115 = sphi 0, %s115
      %s117 = sphi 0, %s115
      %s118 = sphi 0, %s117
      %s132 = sphi 0, %s118
      %s138 = sphi 0, %s140
      %s141 = sphi 0, %s138
      %s142 = sphi 0, %s141
      %s158 = sphi 0, %s142
    $region4: #{tpu_custom_call.1} parent=1 // loop_header_branch
      %21 = sbr.rel (%p19) target = $region8
    $region5: #{tpu_custom_call.1} parent=1 // loop_body
      %s23 = ssub.s32 %s18, 1
      %s24 = ssub.s32 %s18, 2
      %s25 = sadd.s32 %s18, 1
      %s26 = ssub.s32 %s18, %s25
      %p27 = scmp.eq.s32.totalorder %s26, 0
      %s29 = sadd.s32 %s28, 1
      %s30 = scalar_select %p27, %s28, %s29
      %p33 = pneg %p27
      %p34 = scmp.eq.s32.totalorder %s18, 1
      %p35 = por %p33, %p34
      %p36 = scmp.ne.s32.totalorder %s28, %s31
      %p37 = scmp.eq.s32.totalorder %s18, 0
      %p38 = por %p36, %p37
      %p39 = scmp.ne.s32.totalorder %s28, %s31
      %p40 = scmp.eq.s32.totalorder %s23, 1
      %p41 = por %p39, %p40
      %p42 = scmp.ne.s32.totalorder %s31, %s32
      %p43 = scmp.eq.s32.totalorder %s23, 0
      %p44 = por %p42, %p43
      %p45 = scmp.ne.s32.totalorder %s31, %s32
      %p46 = scmp.eq.s32.totalorder %s24, 1
      %p47 = por %p45, %p46
      %p49 = scmp.ne.s32.totalorder %s32, %s48
      %p50 = scmp.eq.s32.totalorder %s24, 0
      %p51 = por %p49, %p50
      %s53 = sadd.s32 %s52, 1
      %p56 = scmp.eq.s32.totalorder %s18, 1
      %p57 = scmp.ne.s32.totalorder %s52, %s54
      %p58 = scmp.eq.s32.totalorder %s18, 0
      %p59 = por %p57, %p58
      %p60 = scmp.ne.s32.totalorder %s52, %s54
      %p61 = scmp.eq.s32.totalorder %s23, 1
      %p62 = por %p60, %p61
      %p63 = scmp.ne.s32.totalorder %s54, %s55
      %p64 = scmp.eq.s32.totalorder %s23, 0
      %p65 = por %p63, %p64
      %p66 = scmp.ne.s32.totalorder %s54, %s55
      %p67 = scmp.eq.s32.totalorder %s24, 1
      %p68 = por %p66, %p67
      %p70 = scmp.ne.s32.totalorder %s55, %s69
      %p71 = scmp.eq.s32.totalorder %s24, 0
      %p72 = por %p70, %p71
      %s74 = sadd.s32 %s73, 1
      %p77 = scmp.eq.s32.totalorder %s18, 1
      %p78 = scmp.ne.s32.totalorder %s73, %s75
      %p79 = scmp.eq.s32.totalorder %s18, 0
      %p80 = por %p78, %p79
      %p81 = scmp.ne.s32.totalorder %s73, %s75
      %p82 = scmp.eq.s32.totalorder %s23, 1
      %p83 = por %p81, %p82
      %p84 = scmp.ne.s32.totalorder %s75, %s76
      %p85 = scmp.eq.s32.totalorder %s23, 0
      %p86 = por %p84, %p85
      %p87 = scmp.ne.s32.totalorder %s75, %s76
      %p88 = scmp.eq.s32.totalorder %s24, 1
      %p89 = por %p87, %p88
      %p91 = scmp.ne.s32.totalorder %s76, %s90
      %p92 = scmp.eq.s32.totalorder %s24, 0
      %p93 = por %p91, %p92
      %s95 = sadd.s32 %s94, 1
      %p98 = scmp.eq.s32.totalorder %s18, 1
      %p99 = scmp.ne.s32.totalorder %s94, %s96
      %p100 = scmp.eq.s32.totalorder %s18, 0
      %p101 = por %p99, %p100
      %p102 = scmp.ne.s32.totalorder %s94, %s96
      %p103 = scmp.eq.s32.totalorder %s23, 1
      %p104 = por %p102, %p103
      %p105 = scmp.ne.s32.totalorder %s96, %s97
      %p106 = scmp.eq.s32.totalorder %s23, 0
      %p107 = por %p105, %p106
      %p108 = scmp.ne.s32.totalorder %s96, %s97
      %p109 = scmp.eq.s32.totalorder %s24, 1
      %p110 = por %p108, %p109
      %p112 = scmp.ne.s32.totalorder %s97, %s111
      %p113 = scmp.eq.s32.totalorder %s24, 0
      %p114 = por %p112, %p113
      %s116 = sadd.s32 %s115, 1
      %p119 = scmp.eq.s32.totalorder %s18, 1
      %p120 = scmp.ne.s32.totalorder %s115, %s117
      %p121 = scmp.eq.s32.totalorder %s18, 0
      %p122 = por %p120, %p121
      %p123 = scmp.ne.s32.totalorder %s115, %s117
      %p124 = scmp.eq.s32.totalorder %s23, 1
      %p125 = por %p123, %p124
      %p126 = scmp.ne.s32.totalorder %s117, %s118
      %p127 = scmp.eq.s32.totalorder %s23, 0
      %p128 = por %p126, %p127
      %p129 = scmp.ne.s32.totalorder %s117, %s118
      %p130 = scmp.eq.s32.totalorder %s24, 1
      %p131 = por %p129, %p130
      %p133 = scmp.ne.s32.totalorder %s118, %s132
      %p134 = scmp.eq.s32.totalorder %s24, 0
      %p135 = por %p133, %p134
      %s136 = ssub.s32 %s18, %s25
      %p137 = scmp.eq.s32.totalorder %s136, 0
      %s139 = sadd.s32 %s138, 1
      %s140 = scalar_select %p137, %s138, %s139
      %p143 = pneg %p137
      %p144 = scmp.eq.s32.totalorder %s18, 1
      %p145 = por %p143, %p144
      %p146 = scmp.ne.s32.totalorder %s138, %s141
      %p147 = scmp.eq.s32.totalorder %s18, 0
      %p148 = por %p146, %p147
      %p149 = scmp.ne.s32.totalorder %s138, %s141
      %p150 = scmp.eq.s32.totalorder %s23, 1
      %p151 = por %p149, %p150
      %p152 = scmp.ne.s32.totalorder %s141, %s142
      %p153 = scmp.eq.s32.totalorder %s23, 0
      %p154 = por %p152, %p153
      %p155 = scmp.ne.s32.totalorder %s141, %s142
      %p156 = scmp.eq.s32.totalorder %s24, 1
      %p157 = por %p155, %p156
      %p159 = scmp.ne.s32.totalorder %s142, %s158
      %p160 = scmp.eq.s32.totalorder %s24, 0
      %p161 = por %p159, %p160
      %p162 = scmp.le.s32.totalorder 1, %s18
      %p163 = scmp.lt.s32.totalorder %s18, 3
      %p164 = pnand %p162, %p163
      %p165 = pneg %p164
      // Predicated region
      $region9: #{tpu_custom_call.1} parent=5 // pred_check
        _
      $region10: #{tpu_custom_call.1} parent=5 // pred_check_branch
        %167 = sbr.rel (%p164) target = $region12
      $region11: #{tpu_custom_call.1} parent=5 // pred_region
        %s168 = ssub.s32 %s18, 1
        // Predicated region
        $region13: #{tpu_custom_call.1} parent=11 // pred_check
          %p169 = pneg %p65
        $region14: #{tpu_custom_call.1} parent=11 // pred_check_branch
          %171 = sbr.rel (%p169) target = $region16
        $region15: #{tpu_custom_call.1} parent=11 // pred_region
          %s173 = ssub.s32 2048, 2048
          %174 = vsyncadd [#allocation6], %s173
          %s175 = sshll.u32 [#allocation5], 4
          %s176 = int_to_ptr.vmem [resolvable:$true] %s175
          %181 = dma.hbm_to_vmem [thread:$0]  %s1, 2048, %s176, [#allocation6], 128, 128, 8
        $region16: #{tpu_custom_call.1} parent=11 // pred_fallthru
          _
        // Predicated region
        $region17: #{tpu_custom_call.1} parent=11 // pred_check
          %p182 = pneg %p86
        $region18: #{tpu_custom_call.1} parent=11 // pred_check_branch
          %184 = sbr.rel (%p182) target = $region20
        $region19: #{tpu_custom_call.1} parent=11 // pred_region
          _
        $region20: #{tpu_custom_call.1} parent=11 // pred_fallthru
          _
        // Predicated region
        $region21: #{tpu_custom_call.1} parent=11 // pred_check
          %p185 = pneg %p107
        $region22: #{tpu_custom_call.1} parent=11 // pred_check_branch
          %187 = sbr.rel (%p185) target = $region24
        $region23: #{tpu_custom_call.1} parent=11 // pred_region
          %s189 = ssub.s32 2048, 2048
          %190 = vsyncadd [#allocation6], %s189
          %s191 = sshll.u32 [#allocation7], 4
          %s192 = int_to_ptr.vmem [resolvable:$true] %s191
          %197 = dma.hbm_to_vmem [thread:$0]  %s3, 2048, %s192, [#allocation6], 128, 128, 8
        $region24: #{tpu_custom_call.1} parent=11 // pred_fallthru
          _
        // Predicated region
        $region25: #{tpu_custom_call.1} parent=11 // pred_check
          %p198 = pneg %p128
        $region26: #{tpu_custom_call.1} parent=11 // pred_check_branch
          %200 = sbr.rel (%p198) target = $region28
        $region27: #{tpu_custom_call.1} parent=11 // pred_region
          _
        $region28: #{tpu_custom_call.1} parent=11 // pred_fallthru
          _
      $region12: #{tpu_custom_call.1} parent=5 // pred_fallthru
        _
      %p201 = scmp.lt.s32.totalorder %s18, 2
      // Predicated region
      $region29: #{tpu_custom_call.1} parent=5 // pred_check
        %p202 = pneg %p201
      $region30: #{tpu_custom_call.1} parent=5 // pred_check_branch
        %204 = sbr.rel (%p202) target = $region32
      $region31: #{tpu_custom_call.1} parent=5 // pred_region
        // Predicated region
        $region33: #{tpu_custom_call.1} parent=31 // pred_check
          %p205 = pneg %p38
        $region34: #{tpu_custom_call.1} parent=31 // pred_check_branch
          %207 = sbr.rel (%p205) target = $region36
        $region35: #{tpu_custom_call.1} parent=31 // pred_region
          %s208 = sand.u32 %s28, 1
          %s209 = scalar_lea.sflag [#allocation3], %s208
          %s210 = sand.u32 %s28, 1
          %s211 = smul.addr %s210, 8
          %s212 = scalar_lea.vmem [#allocation2], %s211
          %s214 = ssub.s32 128, 128
          %215 = vsyncadd %s209, %s214
          %s216 = smul.addr %s18, 128
          %s217 = scalar_lea.hbm %s0, %s216
          %s219 = sshll.u32 %s212, 4
          %s220 = int_to_ptr.vmem [resolvable:$true] %s219
          %222 = dma.hbm_to_vmem [thread:$0]  %s217, 128, %s220, %s209
        $region36: #{tpu_custom_call.1} parent=31 // pred_fallthru
          _
      $region32: #{tpu_custom_call.1} parent=5 // pred_fallthru
        _
      %p223 = scmp.le.s32.totalorder 1, %s18
      %p224 = scmp.lt.s32.totalorder %s18, 3
      %p225 = pnand %p223, %p224
      %p226 = pneg %p225
      // Predicated region
      $region37: #{tpu_custom_call.1} parent=5 // pred_check
        _
      $region38: #{tpu_custom_call.1} parent=5 // pred_check_branch
        %228 = sbr.rel (%p225) target = $region40
      $region39: #{tpu_custom_call.1} parent=5 // pred_region
        %s229 = ssub.s32 %s18, 1
        %s230 = sand.u32 %s31, 1
        %s231 = scalar_lea.sflag [#allocation3], %s230
        %s232 = sand.u32 %s31, 1
        %s233 = smul.addr %s232, 8
        %s234 = scalar_lea.vmem [#allocation2], %s233
        // Predicated region
        $region41: #{tpu_custom_call.1} parent=39 // pred_check
          %p235 = pneg %p44
        $region42: #{tpu_custom_call.1} parent=39 // pred_check_branch
          %237 = sbr.rel (%p235) target = $region44
        $region43: #{tpu_custom_call.1} parent=39 // pred_region
          %238 = dma.done %s231, 128
        $region44: #{tpu_custom_call.1} parent=39 // pred_fallthru
          _
        // Predicated region
        $region45: #{tpu_custom_call.1} parent=39 // pred_check
          %p239 = pneg %p65
        $region46: #{tpu_custom_call.1} parent=39 // pred_check_branch
          %241 = sbr.rel (%p239) target = $region48
        $region47: #{tpu_custom_call.1} parent=39 // pred_region
          %242 = dma.done [#allocation6], 2048
        $region48: #{tpu_custom_call.1} parent=39 // pred_fallthru
          _
        // Predicated region
        $region49: #{tpu_custom_call.1} parent=39 // pred_check
          %p243 = pneg %p107
        $region50: #{tpu_custom_call.1} parent=39 // pred_check_branch
          %245 = sbr.rel (%p243) target = $region52
        $region51: #{tpu_custom_call.1} parent=39 // pred_region
          %246 = dma.done [#allocation6], 2048
        $region52: #{tpu_custom_call.1} parent=39 // pred_fallthru
          _
        %s247 = sand.u32 %s31, 1
        %s248 = scalar_lea.sflag [#allocation3], %s247
        %s249 = sand.u32 %s31, 1
        %s250 = smul.addr %s249, 8
        %s251 = scalar_lea.vmem [#allocation2], %s250
        %p252 = pneg %p44
        %p253 = pneg %p41
        %p254 = pneg %p65
        %p255 = pneg %p62
        %p256 = pneg %p86
        %p257 = pneg %p83
        %p258 = pneg %p107
        %p259 = pneg %p104
        %p260 = pneg %p128
        %p261 = pneg %p125
        %p262 = pneg %p154
        %p263 = pneg %p151
        %s264 = sand.u32 %s141, 1
        %s265 = scalar_lea.sflag [#allocation4], %s264
        %s266 = sand.u32 %s141, 1
        %s267 = smul.addr %s266, 8
        %s268 = scalar_lea.vmem [#allocation8], %s267
        %v269 = vld [vmem:[%s234] sm:$0xff]
        %v270 = vld [vmem:[#allocation5] sm:$0xff]
        %v271 = vld [vmem:[#allocation5 + $0x8] sm:$0xff]
        %v272 = vld [vmem:[#allocation5 + $0x10] sm:$0xff]
        %v273 = vld [vmem:[#allocation5 + $0x18] sm:$0xff]
        %v274 = vld [vmem:[#allocation5 + $0x20] sm:$0xff]
        %v275 = vld [vmem:[#allocation5 + $0x28] sm:$0xff]
        %v276 = vld [vmem:[#allocation5 + $0x30] sm:$0xff]
        %v277 = vld [vmem:[#allocation5 + $0x38] sm:$0xff]
        %v278 = vld [vmem:[#allocation5 + $0x40] sm:$0xff]
        %v279 = vld [vmem:[#allocation5 + $0x48] sm:$0xff]
        %v280 = vld [vmem:[#allocation5 + $0x50] sm:$0xff]
        %v281 = vld [vmem:[#allocation5 + $0x58] sm:$0xff]
        %v282 = vld [vmem:[#allocation5 + $0x60] sm:$0xff]
        %v283 = vld [vmem:[#allocation5 + $0x68] sm:$0xff]
        %v284 = vld [vmem:[#allocation5 + $0x70] sm:$0xff]
        %v285 = vld [vmem:[#allocation5 + $0x78] sm:$0xff]
        %v286 = vld [vmem:[%s2] sm:$0x1]
        %v288 = vlaneseq
        %v289 = vshrl.u32 %v288, 7
        %v290 = vsub.s32 0, %v289
        %v291 = vrot.slane %v286, %v290
        %293 = vmatprep.subr.mxu0 0.0
        %294 = vmatpush1.msra.mxu0 %v270
        %295 = vmatprep.subr.mxu0 0.0
        %296 = vmatpush1.msra.mxu0 %v271
        %297 = vmatprep.subr.mxu0 0.0
        %298 = vmatpush1.msra.mxu0 %v272
        %299 = vmatprep.subr.mxu0 0.0
        %300 = vmatpush1.msra.mxu0 %v273
        %301 = vmatprep.subr.mxu0 0.0
        %302 = vmatpush1.msra.mxu0 %v274
        %303 = vmatprep.subr.mxu0 0.0
        %304 = vmatpush1.msra.mxu0 %v275
        %305 = vmatprep.subr.mxu0 0.0
        %306 = vmatpush1.msra.mxu0 %v276
        %307 = vmatprep.subr.mxu0 0.0
        %308 = vmatpush1.msra.mxu0 %v277
        %309 = vmatprep.subr.mxu0 0.0
        %310 = vmatpush1.msra.mxu0 %v278
        %311 = vmatprep.subr.mxu0 0.0
        %312 = vmatpush1.msra.mxu0 %v279
        %313 = vmatprep.subr.mxu0 0.0
        %314 = vmatpush1.msra.mxu0 %v280
        %315 = vmatprep.subr.mxu0 0.0
        %316 = vmatpush1.msra.mxu0 %v281
        %317 = vmatprep.subr.mxu0 0.0
        %318 = vmatpush1.msra.mxu0 %v282
        %319 = vmatprep.subr.mxu0 0.0
        %320 = vmatpush1.msra.mxu0 %v283
        %321 = vmatprep.subr.mxu0 0.0
        %322 = vmatpush1.msra.mxu0 %v284
        %323 = vmatprep.subr.mxu0 0.0
        %324 = vmatpush1.msra.mxu0 %v285
        %325 = vmatprep.subr.mxu0 0.0
        %326 = vmatpush1.msra.mxu0 0.0
        %327 = vmatprep.subr.mxu0 0.0
        %328 = vmatpush1.msra.mxu0 0.0
        %329 = vmatprep.subr.mxu0 0.0
        %330 = vmatpush1.msra.mxu0 0.0
        %331 = vmatprep.subr.mxu0 0.0
        %332 = vmatpush1.msra.mxu0 0.0
        %333 = vmatprep.subr.mxu0 0.0
        %334 = vmatpush1.msra.mxu0 0.0
        %335 = vmatprep.subr.mxu0 0.0
        %336 = vmatpush1.msra.mxu0 0.0
        %337 = vmatprep.subr.mxu0 0.0
        %338 = vmatpush1.msra.mxu0 0.0
        %339 = vmatprep.subr.mxu0 0.0
        %340 = vmatpush1.msra.mxu0 0.0
        %341 = vmatprep.subr.mxu0 0.0
        %342 = vmatpush1.msra.mxu0 0.0
        %343 = vmatprep.subr.mxu0 0.0
        %344 = vmatpush1.msra.mxu0 0.0
        %345 = vmatprep.subr.mxu0 0.0
        %346 = vmatpush1.msra.mxu0 0.0
        %347 = vmatprep.subr.mxu0 0.0
        %348 = vmatpush1.msra.mxu0 0.0
        %349 = vmatprep.subr.mxu0 0.0
        %350 = vmatpush1.msra.mxu0 0.0
        %351 = vmatprep.subr.mxu0 0.0
        %352 = vmatpush1.msra.mxu0 0.0
        %353 = vmatprep.subr.mxu0 0.0
        %354 = vmatpush1.msra.mxu0 0.0
        %355 = vmatprep.subr.mxu0 0.0
        %356 = vmatpush1.msra.mxu0 0.0
        %357 = vmatprep.mubr.f32.mxu0 0.0
        %358 = vmatmul.mubr.f32.gmra.mrb[0].mxu0 %v269
        %v359 = vpop.f32.mrb[0].mxu0
        %v360 = vadd.f32 %v291, %v359
        %v361 = vpop.f32.mrb[0].mxu0
        %362 = vdwg.mxu0
        %v363 = vmul.f32 %v360, 0.5
        %v364 = vtanh.pop %v363
        %v365 = vadd.f32 %v364, 1.0
        %v366 = vmul.f32 %v363, %v365
        %v367 = vld [vmem:[#allocation7] sm:$0xff]
        %v368 = vld [vmem:[#allocation7 + $0x8] sm:$0xff]
        %v369 = vld [vmem:[#allocation7 + $0x10] sm:$0xff]
        %v370 = vld [vmem:[#allocation7 + $0x18] sm:$0xff]
        %v371 = vld [vmem:[#allocation7 + $0x20] sm:$0xff]
        %v372 = vld [vmem:[#allocation7 + $0x28] sm:$0xff]
        %v373 = vld [vmem:[#allocation7 + $0x30] sm:$0xff]
        %v374 = vld [vmem:[#allocation7 + $0x38] sm:$0xff]
        %v375 = vld [vmem:[#allocation7 + $0x40] sm:$0xff]
        %v376 = vld [vmem:[#allocation7 + $0x48] sm:$0xff]
        %v377 = vld [vmem:[#allocation7 + $0x50] sm:$0xff]
        %v378 = vld [vmem:[#allocation7 + $0x58] sm:$0xff]
        %v379 = vld [vmem:[#allocation7 + $0x60] sm:$0xff]
        %v380 = vld [vmem:[#allocation7 + $0x68] sm:$0xff]
        %v381 = vld [vmem:[#allocation7 + $0x70] sm:$0xff]
        %v382 = vld [vmem:[#allocation7 + $0x78] sm:$0xff]
        %v383 = vld [vmem:[%s4] sm:$0x1]
        %v385 = vlaneseq
        %v386 = vshrl.u32 %v385, 7
        %v387 = vsub.s32 0, %v386
        %v388 = vrot.slane %v383, %v387
        %390 = vmatprep.subr.mxu0 0.0
        %391 = vmatpush1.msra.mxu0 %v367
        %392 = vmatprep.subr.mxu0 0.0
        %393 = vmatpush1.msra.mxu0 %v368
        %394 = vmatprep.subr.mxu0 0.0
        %395 = vmatpush1.msra.mxu0 %v369
        %396 = vmatprep.subr.mxu0 0.0
        %397 = vmatpush1.msra.mxu0 %v370
        %398 = vmatprep.subr.mxu0 0.0
        %399 = vmatpush1.msra.mxu0 %v371
        %400 = vmatprep.subr.mxu0 0.0
        %401 = vmatpush1.msra.mxu0 %v372
        %402 = vmatprep.subr.mxu0 0.0
        %403 = vmatpush1.msra.mxu0 %v373
        %404 = vmatprep.subr.mxu0 0.0
        %405 = vmatpush1.msra.mxu0 %v374
        %406 = vmatprep.subr.mxu0 0.0
        %407 = vmatpush1.msra.mxu0 %v375
        %408 = vmatprep.subr.mxu0 0.0
        %409 = vmatpush1.msra.mxu0 %v376
        %410 = vmatprep.subr.mxu0 0.0
        %411 = vmatpush1.msra.mxu0 %v377
        %412 = vmatprep.subr.mxu0 0.0
        %413 = vmatpush1.msra.mxu0 %v378
        %414 = vmatprep.subr.mxu0 0.0
        %415 = vmatpush1.msra.mxu0 %v379
        %416 = vmatprep.subr.mxu0 0.0
        %417 = vmatpush1.msra.mxu0 %v380
        %418 = vmatprep.subr.mxu0 0.0
        %419 = vmatpush1.msra.mxu0 %v381
        %420 = vmatprep.subr.mxu0 0.0
        %421 = vmatpush1.msra.mxu0 %v382
        %422 = vmatprep.subr.mxu0 0.0
        %423 = vmatpush1.msra.mxu0 0.0
        %424 = vmatprep.subr.mxu0 0.0
        %425 = vmatpush1.msra.mxu0 0.0
        %426 = vmatprep.subr.mxu0 0.0
        %427 = vmatpush1.msra.mxu0 0.0
        %428 = vmatprep.subr.mxu0 0.0
        %429 = vmatpush1.msra.mxu0 0.0
        %430 = vmatprep.subr.mxu0 0.0
        %431 = vmatpush1.msra.mxu0 0.0
        %432 = vmatprep.subr.mxu0 0.0
        %433 = vmatpush1.msra.mxu0 0.0
        %434 = vmatprep.subr.mxu0 0.0
        %435 = vmatpush1.msra.mxu0 0.0
        %436 = vmatprep.subr.mxu0 0.0
        %437 = vmatpush1.msra.mxu0 0.0
        %438 = vmatprep.subr.mxu0 0.0
        %439 = vmatpush1.msra.mxu0 0.0
        %440 = vmatprep.subr.mxu0 0.0
        %441 = vmatpush1.msra.mxu0 0.0
        %442 = vmatprep.subr.mxu0 0.0
        %443 = vmatpush1.msra.mxu0 0.0
        %444 = vmatprep.subr.mxu0 0.0
        %445 = vmatpush1.msra.mxu0 0.0
        %446 = vmatprep.subr.mxu0 0.0
        %447 = vmatpush1.msra.mxu0 0.0
        %448 = vmatprep.subr.mxu0 0.0
        %449 = vmatpush1.msra.mxu0 0.0
        %450 = vmatprep.subr.mxu0 0.0
        %451 = vmatpush1.msra.mxu0 0.0
        %452 = vmatprep.subr.mxu0 0.0
        %453 = vmatpush1.msra.mxu0 0.0
        %454 = vmatprep.mubr.f32.mxu0 0.0
        %455 = vmatmul.mubr.f32.gmra.mrb[0].mxu0 %v366
        %v456 = vpop.f32.mrb[0].mxu0
        %v457 = vadd.f32 %v388, %v456
        %v458 = vpop.f32.mrb[0].mxu0
        %459 = vdwg.mxu0
        %460 = vst [vmem:[%s268] sm:$0xff] %v457
        %s461 = sand.u32 %s141, 1
        %s462 = scalar_lea.sflag [#allocation4], %s461
        %s463 = sand.u32 %s141, 1
        %s464 = smul.addr %s463, 8
        %s465 = scalar_lea.vmem [#allocation8], %s464
        // Predicated region
        $region53: #{tpu_custom_call.1} parent=39 // pred_check
          %p466 = pneg %p151
        $region54: #{tpu_custom_call.1} parent=39 // pred_check_branch
          %468 = sbr.rel (%p466) target = $region56
        $region55: #{tpu_custom_call.1} parent=39 // pred_region
          %s470 = ssub.s32 128, 128
          %471 = vsyncadd %s462, %s470
          %s472 = smul.addr %s23, 128
          %s473 = scalar_lea.hbm %s5, %s472
          %s475 = sshll.u32 %s465, 4
          %s476 = int_to_ptr.vmem [resolvable:$true] %s475
          %478 = dma.vmem_to_hbm [thread:$0]  %s476, 128, %s473, %s462
        $region56: #{tpu_custom_call.1} parent=39 // pred_fallthru
          _
      $region40: #{tpu_custom_call.1} parent=5 // pred_fallthru
        _
      %p479 = scmp.le.s32.totalorder 2, %s18
      // Predicated region
      $region57: #{tpu_custom_call.1} parent=5 // pred_check
        %p480 = pneg %p479
      $region58: #{tpu_custom_call.1} parent=5 // pred_check_branch
        %482 = sbr.rel (%p480) target = $region60
      $region59: #{tpu_custom_call.1} parent=5 // pred_region
        %s483 = ssub.s32 %s18, 2
        // Predicated region
        $region61: #{tpu_custom_call.1} parent=59 // pred_check
          %p484 = pneg %p157
        $region62: #{tpu_custom_call.1} parent=59 // pred_check_branch
          %486 = sbr.rel (%p484) target = $region64
        $region63: #{tpu_custom_call.1} parent=59 // pred_region
          %s487 = sand.u32 %s142, 1
          %s488 = scalar_lea.sflag [#allocation4], %s487
          %s489 = sand.u32 %s142, 1
          %s490 = smul.addr %s489, 8
          %s491 = scalar_lea.vmem [#allocation8], %s490
          %492 = dma.done %s488, 128
        $region64: #{tpu_custom_call.1} parent=59 // pred_fallthru
          _
      $region60: #{tpu_custom_call.1} parent=5 // pred_fallthru
        _
    $region6: #{tpu_custom_call.1} parent=1 // loop_footer
      %s22 = sadd.s32 1, %s18
    $region7: #{tpu_custom_call.1} parent=1 // loop_footer_branch
      %17 = sbr.rel target = $region3
    $region8: #{tpu_custom_call.1} parent=1 // loop_exit
      _
    %493 = vsyncpa [#allocation3], 1
    %s494 = scalar_lea.sflag [#allocation3], 1
    %495 = vsyncpa %s494, 1
    %496 = vsyncpa [#allocation6], 1
    %497 = vsyncpa [#allocation4], 1
    %s498 = scalar_lea.sflag [#allocation4], 1
    %499 = vsyncpa %s498, 1

</llo_original>
